<compile_context>
chip_gen: v5e
topology: v5e:2x2
jax: 0.10.0
libtpu: 0.0.40
codegen_flags: <defaults>
</compile_context>

<pallas_src>
import math
import functools

import jax
import jax.numpy as jnp
from jax.experimental import pallas as pl
from jax.experimental.pallas import tpu as pltpu


def _eca_kernel(w_ref, x_ref, o_ref, *, k, pad, inv_hw, bt):
    # w_ref: (k,) f32 in SMEM (Conv1d weight, no bias)
    # x_ref / o_ref: (bt, C, HWp) f32 tile (C on sublanes, padded HW on lanes)
    c = x_ref.shape[1]
    ch_idx = jax.lax.broadcasted_iota(jnp.int32, (c, 1), 0)   # channel index

    for b in range(bt):                       # bt is small & static (<= 8)
        # Global average pool over (padded) spatial lanes.  Zero-padded columns
        # don't change the sum; divide by the true H*W.
        pooled = jnp.sum(x_ref[b], axis=-1, keepdims=True) * inv_hw    # (C, 1)

        # Zero-padded cross-correlation along channels: k static taps, each a
        # sublane roll (XLU) + edge mask — no concat / sliced copies.
        y = jnp.zeros((c, 1), jnp.float32)
        for j in range(k):
            d = j - pad                       # tap offset: y[c] += w[j]*p[c+d]
            if d == 0:
                tap = pooled
            else:
                shifted = pltpu.roll(pooled, shift=(-d) % c, axis=0)
                valid = (ch_idx + d >= 0) & (ch_idx + d < c)
                tap = jnp.where(valid, shifted, 0.0)
            y = y + w_ref[j] * tap

        gate = jax.nn.sigmoid(y)              # (C, 1)
        # Re-read x_ref (don't keep the big tile live across the epilogue).
        o_ref[b] = x_ref[b] * gate            # gate broadcasts over lanes


def eca_block(x, w, *, target_block_bytes=2 << 20, max_batch_tile=8):
    """ECA forward. x: (B, C, H, W) float32 NCHW; w: (k,) float32 Conv1d weight."""
    B, C, H, W = x.shape
    k = int(w.shape[0])
    pad = (k - 1) // 2
    hw = H * W
    hwp = ((hw + 127) // 128) * 128           # lane-dense, 128-aligned spatial axis

    xf = x.reshape(B, C, hw)
    if hwp != hw:
        # Zero-pad spatial lanes; pooling divisor below stays the true hw.
        xf = jnp.pad(xf, ((0, 0), (0, 0), (0, hwp - hw)))

    # Batch-fold heuristic: biggest tile that (a) stays inside a conservative
    # VMEM budget (in + out are each double-buffered -> ~4x the block bytes),
    # (b) keeps >=2 parallel grid steps when possible (v7x has 2 TensorCores),
    # (c) divides B evenly.
    per_image = C * hwp * xf.dtype.itemsize
    bt = max(1, min(B, max_batch_tile, target_block_bytes // max(per_image, 1)))
    while bt > 1 and pl.cdiv(B, bt) < 2:
        bt -= 1
    while B % bt:
        bt -= 1

    out = pl.pallas_call(
        functools.partial(_eca_kernel, k=k, pad=pad, inv_hw=1.0 / hw, bt=bt),
        out_shape=jax.ShapeDtypeStruct((B, C, hwp), xf.dtype),
        grid=(B // bt,),
        in_specs=[
            pl.BlockSpec(memory_space=pltpu.MemorySpace.SMEM),   # conv weights
            pl.BlockSpec((bt, C, hwp), lambda i: (i, 0, 0)),     # x tile
        ],
        out_specs=pl.BlockSpec((bt, C, hwp), lambda i: (i, 0, 0)),
        compiler_params=pltpu.CompilerParams(
            dimension_semantics=("parallel",)),
    )(w, xf)

    if hwp != hw:
        out = out[:, :, :hw]
    return out.reshape(B, C, H, W)


def _eca_reference(x, w):
    """Plain-JAX reference matching the PyTorch forward exactly."""
    B, C, H, W = x.shape
    k = w.shape[0]
    pad = (k - 1) // 2
    pooled = jnp.mean(x, axis=(2, 3))                        # (B, C)
    padded = jnp.pad(pooled, ((0, 0), (pad, pad)))
    y = sum(w[j] * padded[:, j:j + C] for j in range(k))     # cross-correlation
    gate = jax.nn.sigmoid(y)[:, :, None, None]
    return x * gate


def _eca_kernel_size(channel, b=1, gamma=2):
    ks = int(abs((math.log(channel, 2) + b) / gamma))
    return ks if ks % 2 else ks + 1


if __name__ == "__main__":
    key = jax.random.PRNGKey(0)

    # Case 1: hw already 128-aligned (16*16=256); B=2 -> two parallel grid steps.
    # Case 2: ragged spatial (7*7=49 -> padded to 128) exercises the lane-pad path
    #         (pooling divisor must stay the true H*W).
    for (B, C, H, W) in [(2, 16, 16, 16), (2, 16, 7, 7)]:
        k = _eca_kernel_size(C)                              # C=16 -> k=3
        key, kx, kw = jax.random.split(key, 3)
        x = jax.random.normal(kx, (B, C, H, W), dtype=jnp.float32)

        # Conv1d(1, 1, k, bias=False) weight, uniform in [-1/sqrt(k), 1/sqrt(k)]
        # like the PyTorch default init (PyTorch shape (1, 1, k), flattened).
        bound = 1.0 / math.sqrt(k)
        w = jax.random.uniform(kw, (k,), dtype=jnp.float32,
                               minval=-bound, maxval=bound)

        out = eca_block(x, w)
        jax.block_until_ready(out)

        ref = _eca_reference(x, w)
        assert out.shape == x.shape and out.dtype == x.dtype
        assert jnp.allclose(out, ref, atol=1e-5, rtol=1e-5), "mismatch vs reference"

    print("KERNEL_OK")
</pallas_src>

<mosaic_0001>
module attributes {stable_mosaic.version = 11 : i64} {
  func.func @_eca_kernel(%arg0: i32, %arg1: memref<3xf32, #tpu.memory_space<smem>>, %arg2: memref<1x16x256xf32, #tpu.memory_space<vmem>>, %arg3: memref<1x16x256xf32, #tpu.memory_space<vmem>>) attributes {dimension_semantics = [#tpu.dimension_semantics<parallel>], iteration_bounds = array<i64: 2>, scalar_prefetch = 0 : i64, scratch_operands = 0 : i64, tpu.core_type = #tpu.core_type<tc>, window_params = [{transform_indices = @transform_0, window_bounds = array<i64: 3>}, {transform_indices = @transform_1, window_bounds = array<i64: 1, 16, 256>}, {transform_indices = @transform_2, window_bounds = array<i64: 1, 16, 256>}]} {
    %0 = tpu.iota {dimensions = array<i32: 0>} : vector<16x1xi32>
    %c0 = arith.constant 0 : index
    %c0_0 = arith.constant 0 : index
    %c0_1 = arith.constant 0 : index
    %1 = vector.load %arg2[%c0, %c0_0, %c0_1] : memref<1x16x256xf32, #tpu.memory_space<vmem>>, vector<1x16x256xf32>
    %2 = vector.shape_cast %1 : vector<1x16x256xf32> to vector<16x256xf32>
    %cst = arith.constant dense<0.000000e+00> : vector<16xf32>
    %3 = vector.multi_reduction <add>, %2, %cst [1] : vector<16x256xf32> to vector<16xf32>
    %4 = vector.shape_cast %3 : vector<16xf32> to vector<16x1xf32>
    %cst_2 = arith.constant 3.906250e-03 : f32
    %5 = vector.broadcast %cst_2 : f32 to vector<16x1xf32>
    %6 = arith.mulf %4, %5 : vector<16x1xf32>
    %cst_3 = arith.constant 0.000000e+00 : f32
    %7 = vector.broadcast %cst_3 : f32 to vector<16x1xf32>
    %c1_i32 = arith.constant 1 : i32
    %8 = tpu.dynamic_rotate %6 by %c1_i32 dim 0 : vector<16x1xf32>, i32 -> vector<16x1xf32>
    %c-1_i32 = arith.constant -1 : i32
    %9 = vector.broadcast %c-1_i32 : i32 to vector<16x1xi32>
    %10 = arith.addi %0, %9 : vector<16x1xi32>
    %c0_i32 = arith.constant 0 : i32
    %11 = vector.broadcast %c0_i32 : i32 to vector<16x1xi32>
    %12 = arith.cmpi sge, %10, %11 : vector<16x1xi32>
    %c-1_i32_4 = arith.constant -1 : i32
    %13 = vector.broadcast %c-1_i32_4 : i32 to vector<16x1xi32>
    %14 = arith.addi %0, %13 : vector<16x1xi32>
    %c16_i32 = arith.constant 16 : i32
    %15 = vector.broadcast %c16_i32 : i32 to vector<16x1xi32>
    %16 = arith.cmpi slt, %14, %15 : vector<16x1xi32>
    %17 = arith.andi %12, %16 : vector<16x1xi1>
    %cst_5 = arith.constant 0.000000e+00 : f32
    %18 = vector.broadcast %cst_5 : f32 to vector<16x1xf32>
    %19 = arith.select %17, %8, %18 : vector<16x1xi1>, vector<16x1xf32>
    %c0_6 = arith.constant 0 : index
    %20 = memref.load %arg1[%c0_6] : memref<3xf32, #tpu.memory_space<smem>>
    %21 = vector.broadcast %20 : f32 to vector<16x1xf32>
    %22 = arith.mulf %21, %19 : vector<16x1xf32>
    %23 = arith.addf %7, %22 : vector<16x1xf32>
    %c1 = arith.constant 1 : index
    %24 = memref.load %arg1[%c1] : memref<3xf32, #tpu.memory_space<smem>>
    %25 = vector.broadcast %24 : f32 to vector<16x1xf32>
    %26 = arith.mulf %25, %6 : vector<16x1xf32>
    %27 = arith.addf %23, %26 : vector<16x1xf32>
    %c15_i32 = arith.constant 15 : i32
    %28 = tpu.dynamic_rotate %6 by %c15_i32 dim 0 : vector<16x1xf32>, i32 -> vector<16x1xf32>
    %c1_i32_7 = arith.constant 1 : i32
    %29 = vector.broadcast %c1_i32_7 : i32 to vector<16x1xi32>
    %30 = arith.addi %0, %29 : vector<16x1xi32>
    %c0_i32_8 = arith.constant 0 : i32
    %31 = vector.broadcast %c0_i32_8 : i32 to vector<16x1xi32>
    %32 = arith.cmpi sge, %30, %31 : vector<16x1xi32>
    %c1_i32_9 = arith.constant 1 : i32
    %33 = vector.broadcast %c1_i32_9 : i32 to vector<16x1xi32>
    %34 = arith.addi %0, %33 : vector<16x1xi32>
    %c16_i32_10 = arith.constant 16 : i32
    %35 = vector.broadcast %c16_i32_10 : i32 to vector<16x1xi32>
    %36 = arith.cmpi slt, %34, %35 : vector<16x1xi32>
    %37 = arith.andi %32, %36 : vector<16x1xi1>
    %cst_11 = arith.constant 0.000000e+00 : f32
    %38 = vector.broadcast %cst_11 : f32 to vector<16x1xf32>
    %39 = arith.select %37, %28, %38 : vector<16x1xi1>, vector<16x1xf32>
    %c2 = arith.constant 2 : index
    %40 = memref.load %arg1[%c2] : memref<3xf32, #tpu.memory_space<smem>>
    %41 = vector.broadcast %40 : f32 to vector<16x1xf32>
    %42 = arith.mulf %41, %39 : vector<16x1xf32>
    %43 = arith.addf %27, %42 : vector<16x1xf32>
    %44 = arith.negf %43 : vector<16x1xf32>
    %45 = math.exp %44 : vector<16x1xf32>
    %cst_12 = arith.constant 1.000000e+00 : f32
    %46 = vector.broadcast %cst_12 : f32 to vector<16x1xf32>
    %47 = arith.addf %46, %45 : vector<16x1xf32>
    %48 = arith.divf %46, %47 : vector<16x1xf32>
    %c0_13 = arith.constant 0 : index
    %c0_14 = arith.constant 0 : index
    %c0_15 = arith.constant 0 : index
    %49 = vector.load %arg2[%c0_13, %c0_14, %c0_15] : memref<1x16x256xf32, #tpu.memory_space<vmem>>, vector<1x16x256xf32>
    %50 = vector.shape_cast %49 : vector<1x16x256xf32> to vector<16x256xf32>
    %51 = vector.broadcast %48 : vector<16x1xf32> to vector<16x256xf32>
    %52 = arith.mulf %50, %51 : vector<16x256xf32>
    %c0_16 = arith.constant 0 : index
    %c0_17 = arith.constant 0 : index
    %c0_18 = arith.constant 0 : index
    %53 = vector.load %arg3[%c0_16, %c0_17, %c0_18] : memref<1x16x256xf32, #tpu.memory_space<vmem>>, vector<1x16x256xf32>
    %54 = vector.shape_cast %53 : vector<1x16x256xf32> to vector<16x256xf32>
    %55 = vector.shape_cast %52 : vector<16x256xf32> to vector<1x16x256xf32>
    tpu.vector_store %arg3[%c0_16, %c0_17, %c0_18], %55 {strides = array<i32>} : memref<1x16x256xf32, #tpu.memory_space<vmem>>, vector<1x16x256xf32>,
    return
  }
  func.func @transform_0(%arg0: i32) -> i32 {
    %c0_i32 = arith.constant 0 : i32
    %c0_i32_0 = arith.constant 0 : i32
    return %c0_i32 : i32
  }
  func.func @transform_1(%arg0: i32) -> (i32, i32, i32) {
    %c0_i32 = arith.constant 0 : i32
    %c0_i32_0 = arith.constant 0 : i32
    %c0_i32_1 = arith.constant 0 : i32
    return %arg0, %c0_i32, %c0_i32_0 : i32, i32, i32
  }
  func.func @transform_2(%arg0: i32) -> (i32, i32, i32) {
    %c0_i32 = arith.constant 0 : i32
    %c0_i32_0 = arith.constant 0 : i32
    %c0_i32_1 = arith.constant 0 : i32
    return %arg0, %c0_i32, %c0_i32_0 : i32, i32, i32
  }
}

</mosaic_0001>

<llo_original>
// kernel: tpu_custom_call.1
$region0: #{tpu_custom_call.1}
  #allocation0 [shape = 'u32[]', space=smem, size = 0x4, offset = 0x4, fixed_abs, tag = 'smem constant byte address 0x4 - core index']
  #allocation1 [shape = 'u32[72,128]{1,0:T(1,128)}', space=vmem, size = 0x9000, scoped, tag = 'internal scratch']
  %s0 = inlined_call_operand.hbm [shape: f32[3], index: 0, kind: input, shape index: {}]
  %s1 = inlined_call_operand.hbm [shape: f32[2,16,256], index: 1, kind: input, shape index: {}]
  %s2 = inlined_call_operand.hbm [shape: f32[2,16,256], index: 2, kind: output, shape index: {}]
  %s3 = sld [smem:[#allocation0]]
  $region49: #{tpu_custom_call.1} parent=0
    _
  %s5 = ssub.s32 1, %s3
  %s6 = scalar_select 0, %s5, %s3
  $region1: #{tpu_custom_call.1} parent=0
    #allocation2 [shape = 'u8[512]{0}', space=smem, size = 0x200, scoped, tag = 'input window, operand 0, single buffered']
    #allocation3 [shape = 's32[2]{0}', space=sflag, size = 0x8, scoped, tag = 'scoped memory for tpu_custom_call.1']
    #allocation4 [shape = 's32[2]{0}', space=sflag, size = 0x8, scoped, tag = 'scoped memory for tpu_custom_call.1']
    #allocation5 [shape = 's32[2]{0}', space=sflag, size = 0x8, scoped, tag = 'scoped memory for tpu_custom_call.1']
    #allocation6 [shape = 'u8[32768]{0}', space=vmem, size = 0x8000, scoped, tag = 'input window, operand 1']
    #allocation7 [shape = 'u8[32768]{0}', space=vmem, size = 0x8000, scoped, tag = 'output window, operand 0']
    %7 = vsyncpa [#allocation5], 0
    %8 = vsyncpa [#allocation3], 0
    %s9 = scalar_lea.sflag [#allocation3], 1
    %10 = vsyncpa %s9, 0
    %11 = vsyncpa [#allocation4], 0
    %s12 = scalar_lea.sflag [#allocation4], 1
    %13 = vsyncpa %s12, 0
    loop: start=0, step=1, limit=4
    $region2: #{tpu_custom_call.1} parent=1 // loop_pre_header
      _
    $region3: #{tpu_custom_call.1} parent=1 // loop_header
      %s15 = sphi 0, %s19
      %p16 = scmp.ge.s32.totalorder %s15, 4
      %s23 = sphi 0, %s23
      %s25 = sphi 0, %s23
      %s26 = sphi 0, %s25
      %s40 = sphi 0, %s26
      %s46 = sphi 0, %s48
      %s49 = sphi 0, %s46
      %s50 = sphi 0, %s49
      %s66 = sphi 0, %s50
      %s72 = sphi 0, %s74
      %s75 = sphi 0, %s72
      %s76 = sphi 0, %s75
      %s92 = sphi 0, %s76
    $region4: #{tpu_custom_call.1} parent=1 // loop_header_branch
      %18 = sbr.rel (%p16) target = $region8
    $region5: #{tpu_custom_call.1} parent=1 // loop_body
      %s20 = ssub.s32 %s15, 1
      %s21 = ssub.s32 %s15, 2
      %s22 = sadd.s32 %s15, 1
      %s24 = sadd.s32 %s23, 1
      %p27 = scmp.eq.s32.totalorder %s15, 1
      %p28 = scmp.ne.s32.totalorder %s23, %s25
      %p29 = scmp.eq.s32.totalorder %s15, 0
      %p30 = por %p28, %p29
      %p31 = scmp.ne.s32.totalorder %s23, %s25
      %p32 = scmp.eq.s32.totalorder %s20, 1
      %p33 = por %p31, %p32
      %p34 = scmp.ne.s32.totalorder %s25, %s26
      %p35 = scmp.eq.s32.totalorder %s20, 0
      %p36 = por %p34, %p35
      %p37 = scmp.ne.s32.totalorder %s25, %s26
      %p38 = scmp.eq.s32.totalorder %s21, 1
      %p39 = por %p37, %p38
      %p41 = scmp.ne.s32.totalorder %s26, %s40
      %p42 = scmp.eq.s32.totalorder %s21, 0
      %p43 = por %p41, %p42
      %s44 = ssub.s32 %s15, %s22
      %p45 = scmp.eq.s32.totalorder %s44, 0
      %s47 = sadd.s32 %s46, 1
      %s48 = scalar_select %p45, %s46, %s47
      %p51 = pneg %p45
      %p52 = scmp.eq.s32.totalorder %s15, 1
      %p53 = por %p51, %p52
      %p54 = scmp.ne.s32.totalorder %s46, %s49
      %p55 = scmp.eq.s32.totalorder %s15, 0
      %p56 = por %p54, %p55
      %p57 = scmp.ne.s32.totalorder %s46, %s49
      %p58 = scmp.eq.s32.totalorder %s20, 1
      %p59 = por %p57, %p58
      %p60 = scmp.ne.s32.totalorder %s49, %s50
      %p61 = scmp.eq.s32.totalorder %s20, 0
      %p62 = por %p60, %p61
      %p63 = scmp.ne.s32.totalorder %s49, %s50
      %p64 = scmp.eq.s32.totalorder %s21, 1
      %p65 = por %p63, %p64
      %p67 = scmp.ne.s32.totalorder %s50, %s66
      %p68 = scmp.eq.s32.totalorder %s21, 0
      %p69 = por %p67, %p68
      %s70 = ssub.s32 %s15, %s22
      %p71 = scmp.eq.s32.totalorder %s70, 0
      %s73 = sadd.s32 %s72, 1
      %s74 = scalar_select %p71, %s72, %s73
      %p77 = pneg %p71
      %p78 = scmp.eq.s32.totalorder %s15, 1
      %p79 = por %p77, %p78
      %p80 = scmp.ne.s32.totalorder %s72, %s75
      %p81 = scmp.eq.s32.totalorder %s15, 0
      %p82 = por %p80, %p81
      %p83 = scmp.ne.s32.totalorder %s72, %s75
      %p84 = scmp.eq.s32.totalorder %s20, 1
      %p85 = por %p83, %p84
      %p86 = scmp.ne.s32.totalorder %s75, %s76
      %p87 = scmp.eq.s32.totalorder %s20, 0
      %p88 = por %p86, %p87
      %p89 = scmp.ne.s32.totalorder %s75, %s76
      %p90 = scmp.eq.s32.totalorder %s21, 1
      %p91 = por %p89, %p90
      %p93 = scmp.ne.s32.totalorder %s76, %s92
      %p94 = scmp.eq.s32.totalorder %s21, 0
      %p95 = por %p93, %p94
      %p96 = scmp.le.s32.totalorder 1, %s15
      %p97 = scmp.lt.s32.totalorder %s15, 3
      %p98 = pnand %p96, %p97
      %p99 = pneg %p98
      // Predicated region
      $region9: #{tpu_custom_call.1} parent=5 // pred_check
        _
      $region10: #{tpu_custom_call.1} parent=5 // pred_check_branch
        %101 = sbr.rel (%p98) target = $region12
      $region11: #{tpu_custom_call.1} parent=5 // pred_region
        %s102 = ssub.s32 %s15, 1
        // Predicated region
        $region13: #{tpu_custom_call.1} parent=11 // pred_check
          %p103 = pneg %p36
        $region14: #{tpu_custom_call.1} parent=11 // pred_check_branch
          %105 = sbr.rel (%p103) target = $region16
        $region15: #{tpu_custom_call.1} parent=11 // pred_region
          %107 = vsyncadd [#allocation5], 0
          %s109 = sshll.u32 %s0, 4
          %s110 = int_to_ptr.hbm [resolvable:$true] %s109
          %112 = dma.hbm_to_smem %s110, 16, [#allocation2], [#allocation5]
        $region16: #{tpu_custom_call.1} parent=11 // pred_fallthru
          _
      $region12: #{tpu_custom_call.1} parent=5 // pred_fallthru
        _
      %p113 = scmp.lt.s32.totalorder %s15, 2
      // Predicated region
      $region17: #{tpu_custom_call.1} parent=5 // pred_check
        %p114 = pneg %p113
      $region18: #{tpu_custom_call.1} parent=5 // pred_check_branch
        %116 = sbr.rel (%p114) target = $region20
      $region19: #{tpu_custom_call.1} parent=5 // pred_region
        // Predicated region
        $region21: #{tpu_custom_call.1} parent=19 // pred_check
          %p117 = pneg %p56
        $region22: #{tpu_custom_call.1} parent=19 // pred_check_branch
          %119 = sbr.rel (%p117) target = $region24
        $region23: #{tpu_custom_call.1} parent=19 // pred_region
          %s120 = sand.u32 %s46, 1
          %s121 = scalar_lea.sflag [#allocation3], %s120
          %s122 = sand.u32 %s46, 1
          %s123 = smul.addr %s122, 32
          %s124 = scalar_lea.vmem [#allocation6], %s123
          %126 = vsyncadd %s121, 0
          %s127 = smul.addr %s15, 4
          %s128 = smul.addr %s127, 8
          %s129 = scalar_lea.hbm %s1, %s128
          %s130 = sshll.u32 %s129, 4
          %s131 = int_to_ptr.hbm [resolvable:$true] %s130
          %s132 = sshll.u32 %s124, 4
          %s133 = int_to_ptr.vmem [resolvable:$true] %s132
          %138 = dma.hbm_to_vmem [thread:$0]  %s131, 512, %s133, %s121, 256, 256, 16
        $region24: #{tpu_custom_call.1} parent=19 // pred_fallthru
          _
      $region20: #{tpu_custom_call.1} parent=5 // pred_fallthru
        _
      %p139 = scmp.le.s32.totalorder 1, %s15
      %p140 = scmp.lt.s32.totalorder %s15, 3
      %p141 = pnand %p139, %p140
      %p142 = pneg %p141
      // Predicated region
      $region25: #{tpu_custom_call.1} parent=5 // pred_check
        _
      $region26: #{tpu_custom_call.1} parent=5 // pred_check_branch
        %144 = sbr.rel (%p141) target = $region28
      $region27: #{tpu_custom_call.1} parent=5 // pred_region
        %s145 = ssub.s32 %s15, 1
        // Predicated region
        $region29: #{tpu_custom_call.1} parent=27 // pred_check
          %p146 = pneg %p36
        $region30: #{tpu_custom_call.1} parent=27 // pred_check_branch
          %148 = sbr.rel (%p146) target = $region32
        $region31: #{tpu_custom_call.1} parent=27 // pred_region
          %150 = dma.done [#allocation5], 16
        $region32: #{tpu_custom_call.1} parent=27 // pred_fallthru
          _
        %s151 = sand.u32 %s49, 1
        %s152 = scalar_lea.sflag [#allocation3], %s151
        %s153 = sand.u32 %s49, 1
        %s154 = smul.addr %s153, 32
        %s155 = scalar_lea.vmem [#allocation6], %s154
        // Predicated region
        $region33: #{tpu_custom_call.1} parent=27 // pred_check
          %p156 = pneg %p62
        $region34: #{tpu_custom_call.1} parent=27 // pred_check_branch
          %158 = sbr.rel (%p156) target = $region36
        $region35: #{tpu_custom_call.1} parent=27 // pred_region
          %160 = dma.done %s152, 512
        $region36: #{tpu_custom_call.1} parent=27 // pred_fallthru
          _
        %161 = sfence
        %p162 = pneg %p36
        %p163 = pneg %p33
        %s164 = sand.u32 %s49, 1
        %s165 = scalar_lea.sflag [#allocation3], %s164
        %s166 = sand.u32 %s49, 1
        %s167 = smul.addr %s166, 32
        %s168 = scalar_lea.vmem [#allocation6], %s167
        %p169 = pneg %p62
        %p170 = pneg %p59
        %p171 = pneg %p88
        %p172 = pneg %p85
        %s173 = sand.u32 %s75, 1
        %s174 = scalar_lea.sflag [#allocation4], %s173
        %s175 = sand.u32 %s75, 1
        %s176 = smul.addr %s175, 32
        %s177 = scalar_lea.vmem [#allocation7], %s176
        %v178 = vlaneseq
        %v179 = vshrl.u32 %v178, 7
        %v180 = vadd.s32 %v179, 8
        %v181 = vld [vmem:[%s155] sm:$0xff]
        %v182 = vld [vmem:[%s155 + $0x8] sm:$0xff]
        %v183 = vld [vmem:[%s155 + $0x10] sm:$0xff]
        %v184 = vld [vmem:[%s155 + $0x18] sm:$0xff]
        %v185 = vadd.f32 %v181, %v182
        %186 = vadd.xlane.f32.xlu0 %v185
        %v187 = vpop.xlane.xlu0 %186
        %v188 = vadd.f32 %v183, %v184
        %189 = vadd.xlane.f32.xlu0 %v188
        %v190 = vpop.xlane.xlu0 %189
        %v191 = vmul.f32 %v187, 0.00390625
        %v192 = vmul.f32 %v190, 0.00390625
        %v193 = vrot.slane %v191, 7
        %v194 = vrot.slane %v192, 7
        %vm195 = vcmp.lt.s32.totalorder %v179, 1
        %v196 = vsel %vm195, %v193, %v194
        %v197 = vsel %vm195, %v194, %v193
        %v198 = vadd.s32 %v179, 4294967295
        %v199 = vadd.s32 %v180, 4294967295
        %vm200 = vcmp.ge.s32.totalorder %v198, 0
        %vm201 = vcmp.ge.s32.totalorder %v199, 0
        %vm202 = vcmp.lt.s32.totalorder %v198, 16
        %vm203 = vcmp.lt.s32.totalorder %v199, 16
        %vm204 = vmand %vm200, %vm202
        %vm205 = vmand %vm201, %vm203
        %v206 = vsel %vm204, %v197, 0.0
        %v207 = vsel %vm205, %v196, 0.0
        %s208 = sld [smem:[#allocation2]]
        %v209 = vstv %s208
        %v210 = vmul.f32 %v209, %v206
        %v211 = vmul.f32 %v209, %v207
        %v212 = vadd.f32 %v210, 0.0
        %v213 = vadd.f32 %v211, 0.0
        %s214 = sld [smem:[#allocation2 + $0x1]]
        %v215 = vstv %s214
        %v216 = vmul.f32 %v215, %v191
        %v217 = vmul.f32 %v215, %v192
        %v218 = vadd.f32 %v212, %v216
        %v219 = vadd.f32 %v213, %v217
        %v220 = vrot.slane %v191, 1
        %v221 = vrot.slane %v192, 1
        %vm222 = vcmp.lt.s32.totalorder %v179, 7
        %v223 = vsel %vm222, %v220, %v221
        %v224 = vsel %vm222, %v221, %v220
        %v225 = vadd.s32 %v179, 1
        %v226 = vadd.s32 %v180, 1
        %vm227 = vcmp.ge.s32.totalorder %v225, 0
        %vm228 = vcmp.ge.s32.totalorder %v226, 0
        %vm229 = vcmp.lt.s32.totalorder %v225, 16
        %vm230 = vcmp.lt.s32.totalorder %v226, 16
        %vm231 = vmand %vm227, %vm229
        %vm232 = vmand %vm228, %vm230
        %v233 = vsel %vm231, %v223, 0.0
        %v234 = vsel %vm232, %v224, 0.0
        %s235 = sld [smem:[#allocation2 + $0x2]]
        %v236 = vstv %s235
        %v237 = vmul.f32 %v236, %v233
        %v238 = vmul.f32 %v236, %v234
        %v239 = vadd.f32 %v218, %v237
        %v240 = vadd.f32 %v219, %v238
        %v241 = vxor.u32 %v239, 2147483648
        %v242 = vxor.u32 %v240, 2147483648
        %v243 = vmul.f32 %v241, 1.442695
        %v244 = vpow.pop %v243
        %v245 = vmul.f32 %v242, 1.442695
        %v246 = vpow.pop %v245
        %v247 = vadd.f32 %v244, 1.0
        %v248 = vadd.f32 %v246, 1.0
        %v249 = vrcp.pop %v247
        %v250 = vmul.f32 %v247, %v249
        %v251 = vsub.f32 1.0, %v250
        %v252 = vmul.f32 %v249, %v251
        %v253 = vadd.f32 %v249, %v252
        %vm254 = vweird.f32 %v247
        %vm255 = vweird.f32 %v249
        %vm256 = vmor %vm254, %vm255
        %v257 = vsel %vm256, %v249, %v253
        %v258 = vand.u32 2147483647, %v247
        %vm259 = vcmp.eq.f32.partialorder %v258, 8.507059e+37
        %v260 = vand.u32 %v247, 2147483648
        %v261 = vor.u32 1.1754944e-38, %v260
        %v262 = vsel %vm259, %v261, %v257
        %v263 = vmul.f32 1.0, %v262
        %v264 = vrcp.pop %v248
        %v265 = vmul.f32 %v248, %v264
        %v266 = vsub.f32 1.0, %v265
        %v267 = vmul.f32 %v264, %v266
        %v268 = vadd.f32 %v264, %v267
        %vm269 = vweird.f32 %v248
        %vm270 = vweird.f32 %v264
        %vm271 = vmor %vm269, %vm270
        %v272 = vsel %vm271, %v264, %v268
        %v273 = vand.u32 2147483647, %v248
        %vm274 = vcmp.eq.f32.partialorder %v273, 8.507059e+37
        %v275 = vand.u32 %v248, 2147483648
        %v276 = vor.u32 1.1754944e-38, %v275
        %v277 = vsel %vm274, %v276, %v272
        %v278 = vmul.f32 1.0, %v277
        %280 = vset.pattern.permute.xlu0 0
        %281 = vperm.xlu0 %280, %v263
        %v282 = vpop.permute.xlu0 %281
        %285 = vset.pattern.permute.xlu0 0
        %286 = vperm.xlu0 %285, %v278
        %v287 = vpop.permute.xlu0 %286
        %v289 = vmul.f32 %v181, %v282
        %v290 = vmul.f32 %v182, %v282
        %v291 = vmul.f32 %v183, %v287
        %v292 = vmul.f32 %v184, %v287
        %293 = vst [vmem:[%s177] sm:$0xff] %v289
        %294 = vst [vmem:[%s177 + $0x8] sm:$0xff] %v290
        %295 = vst [vmem:[%s177 + $0x10] sm:$0xff] %v291
        %296 = vst [vmem:[%s177 + $0x18] sm:$0xff] %v292
        %s297 = sand.u32 %s75, 1
        %s298 = scalar_lea.sflag [#allocation4], %s297
        %s299 = sand.u32 %s75, 1
        %s300 = smul.addr %s299, 32
        %s301 = scalar_lea.vmem [#allocation7], %s300
        // Predicated region
        $region37: #{tpu_custom_call.1} parent=27 // pred_check
          %p302 = pneg %p85
        $region38: #{tpu_custom_call.1} parent=27 // pred_check_branch
          %304 = sbr.rel (%p302) target = $region40
        $region39: #{tpu_custom_call.1} parent=27 // pred_region
          %306 = vsyncadd %s298, 0
          %s307 = smul.addr %s20, 4
          %s308 = smul.addr %s307, 8
          %s309 = scalar_lea.hbm %s2, %s308
          %s310 = sshll.u32 %s301, 4
          %s311 = int_to_ptr.vmem [resolvable:$true] %s310
          %s312 = sshll.u32 %s309, 4
          %s313 = int_to_ptr.hbm [resolvable:$true] %s312
          %318 = dma.vmem_to_hbm [thread:$0]  %s311, 512, %s313, %s298, 256, 256, 16
        $region40: #{tpu_custom_call.1} parent=27 // pred_fallthru
          _
      $region28: #{tpu_custom_call.1} parent=5 // pred_fallthru
        _
      %p319 = scmp.le.s32.totalorder 2, %s15
      // Predicated region
      $region41: #{tpu_custom_call.1} parent=5 // pred_check
        %p320 = pneg %p319
      $region42: #{tpu_custom_call.1} parent=5 // pred_check_branch
        %322 = sbr.rel (%p320) target = $region44
      $region43: #{tpu_custom_call.1} parent=5 // pred_region
        %s323 = ssub.s32 %s15, 2
        // Predicated region
        $region45: #{tpu_custom_call.1} parent=43 // pred_check
          %p324 = pneg %p91
        $region46: #{tpu_custom_call.1} parent=43 // pred_check_branch
          %326 = sbr.rel (%p324) target = $region48
        $region47: #{tpu_custom_call.1} parent=43 // pred_region
          %s327 = sand.u32 %s76, 1
          %s328 = scalar_lea.sflag [#allocation4], %s327
          %s329 = sand.u32 %s76, 1
          %s330 = smul.addr %s329, 32
          %s331 = scalar_lea.vmem [#allocation7], %s330
          %333 = dma.done %s328, 512
        $region48: #{tpu_custom_call.1} parent=43 // pred_fallthru
          _
      $region44: #{tpu_custom_call.1} parent=5 // pred_fallthru
        _
    $region6: #{tpu_custom_call.1} parent=1 // loop_footer
      %s19 = sadd.s32 1, %s15
    $region7: #{tpu_custom_call.1} parent=1 // loop_footer_branch
      %14 = sbr.rel target = $region3
    $region8: #{tpu_custom_call.1} parent=1 // loop_exit
      _
    %334 = vsyncpa [#allocation3], 1
    %s335 = scalar_lea.sflag [#allocation3], 1
    %336 = vsyncpa %s335, 1
    %337 = vsyncpa [#allocation4], 1
    %s338 = scalar_lea.sflag [#allocation4], 1
    %339 = vsyncpa %s338, 1
    %340 = vsyncpa [#allocation5], 1
    %s341 = scalar_lea.sflag [#allocation5], 1
    %342 = vsyncpa %s341, 1

</llo_original>
